<compile_context>
chip_gen: v7x
topology: tpu7x:2x2x1
jax: 0.10.0
libtpu: 0.0.40
codegen_flags: <defaults>
</compile_context>

<pallas_src>
import functools

import jax
import jax.numpy as jnp
from jax.experimental import pallas as pl
from jax.experimental.pallas import tpu as pltpu


def _bce_partial_kernel(outs_ref, labels_ref, acc_ref, *,
                        tile_r, lanes, sub_r, steps_per_split,
                        full_rows, rem):
    p = pl.program_id(0)   # core-split ("parallel") axis
    i = pl.program_id(1)   # reduction ("arbitrary") axis

    @pl.when(i == 0)
    def _():
        acc_ref[...] = jnp.zeros_like(acc_ref)

    row_start = (p * steps_per_split + i) * tile_r
    n_slabs = tile_r // sub_r

    def accumulate(masked):
        def slab(s, carry):
            r0 = pl.multiple_of(s * sub_r, sub_r)
            o = outs_ref[pl.ds(r0, sub_r), :].astype(jnp.float32)
            l = labels_ref[pl.ds(r0, sub_r), :].astype(jnp.float32)
            # elementwise BCE with the same 1e-5 epsilon as the PyTorch module
            bce = (-l * jnp.log(o + 1e-5)
                   - (1.0 - l) * jnp.log(1.0 - o + 1e-5))
            if masked:
                # Only the boundary block pays for the iota/compare/select.
                grow = (row_start + r0
                        + jax.lax.broadcasted_iota(jnp.int32, (sub_r, lanes), 0))
                col = jax.lax.broadcasted_iota(jnp.int32, (sub_r, lanes), 1)
                valid = (grow < full_rows) | ((grow == full_rows) & (col < rem))
                # select-style mask (never multiply): NaN/Inf from the ragged
                # overhang region cannot propagate.
                bce = jnp.where(valid, bce, 0.0)
            # VPU-only partial accumulation into the resident (8, lanes) slab;
            # the cross-lane reduction to a scalar happens once, outside.
            acc_ref[...] += jnp.sum(bce.reshape(sub_r // 8, 8, lanes), axis=0)
            return carry
        jax.lax.fori_loop(0, n_slabs, slab, 0, unroll=True)

    needs_mask = row_start + tile_r > full_rows

    @pl.when(needs_mask)
    def _():
        accumulate(True)

    @pl.when(jnp.logical_not(needs_mask))
    def _():
        accumulate(False)


def _chip_config():
    """(max_tile_rows, num_splits, vmem_limit_bytes) - safe defaults fit v7x."""
    max_tile_rows, num_splits, vmem_limit = 1024, 1, 48 * 1024 * 1024
    try:
        info = pltpu.get_tpu_info()
        vmem = int(getattr(info, "vmem_capacity_bytes", 0) or 0)
        if vmem >= 100 * 1024 * 1024:
            # v5e / v6e class: 128 MiB VMEM, single TensorCore -> bigger tiles.
            max_tile_rows, vmem_limit = 2048, 80 * 1024 * 1024
        elif vmem > 0:
            # v7x class: 64 MiB VMEM / TC, two TensorCores -> split rows.
            num_splits = 2
    except Exception:
        pass  # unknown chip / API drift: keep conservative v7x-safe defaults
    return max_tile_rows, num_splits, vmem_limit


def normal_likelihood_bce_loss(outs, labels, cost_style="mean"):
    """Pallas TPU implementation of normalLikelihoodBCEloss.forward.

    outs, labels: (B, D) float arrays (f32 or bf16) with outs in (0, 1).
    Returns a scalar float32 loss.
    """
    assert outs.shape == labels.shape and outs.ndim == 2
    B, D = outs.shape
    N = B * D

    # mean over dim 1 then sum/mean over batch == total_sum * constant:
    #   'sum'  -> total_sum / D ;  'mean' -> total_sum / (B * D)
    inv_scale = (1.0 / D) if cost_style == "sum" else (1.0 / N)

    max_tile_rows, cfg_splits, vmem_limit = _chip_config()

    # Lane width: largest of {1024,512,256,128} dividing N -> zero-copy reshape.
    lanes = None
    for cand in (1024, 512, 256, 128):
        if N % cand == 0:
            lanes = cand
            break

    o_flat = outs.reshape(-1)
    l_flat = labels.reshape(-1)
    if lanes is None:
        # Rare ragged case: minimal pad to one multiple of 128 lanes (never up
        # to a full grid of tiles); the tail is masked inside the kernel.
        # TODO(synk): handle the <128-element tail in plain jnp to also avoid
        # this copy for very large unaligned N.
        lanes = 128
        pad = (-N) % lanes
        o_flat = jnp.pad(o_flat, (0, pad))
        l_flat = jnp.pad(l_flat, (0, pad))

    rows = o_flat.shape[0] // lanes
    o2d = o_flat.reshape(rows, lanes)
    l2d = l_flat.reshape(rows, lanes)

    if rows < 8:
        # Tiny input: pad rows up to the 8-sublane minimum (a few KiB at most).
        o2d = jnp.pad(o2d, ((0, 8 - rows), (0, 0)))
        l2d = jnp.pad(l2d, ((0, 8 - rows), (0, 0)))
        rows = 8

    full_rows, rem = N // lanes, N % lanes

    if rows >= max_tile_rows:
        tile_r, sub_r = max_tile_rows, 128
    else:
        tile_r = (rows // 8) * 8   # <= rows, multiple of 8: standard ragged tiling
        sub_r = tile_r             # single slab; whole block is small anyway

    row_blocks = pl.cdiv(rows, tile_r)
    num_splits = cfg_splits if row_blocks >= cfg_splits else 1
    steps_per_split = pl.cdiv(row_blocks, num_splits)

    kernel = functools.partial(
        _bce_partial_kernel, tile_r=tile_r, lanes=lanes, sub_r=sub_r,
        steps_per_split=steps_per_split, full_rows=full_rows, rem=rem)

    def in_map(p, i):
        # Clamp: an overhanging block index in the last split re-reads the final
        # block; its contribution is masked to zero in-kernel (row_start >= N).
        return (jnp.minimum(p * steps_per_split + i, row_blocks - 1), 0)

    # TODO(synk): on v7x, verify 2-TC sharding of the leading axis (consider
    # pltpu.CORE_PARALLEL / pl.core_map); plain "parallel" is the safe default.
    partials = pl.pallas_call(
        kernel,
        out_shape=jax.ShapeDtypeStruct((num_splits * 8, lanes), jnp.float32),
        grid_spec=pltpu.PrefetchScalarGridSpec(
            num_scalar_prefetch=0,
            grid=(num_splits, steps_per_split),
            in_specs=[
                pl.BlockSpec((tile_r, lanes), in_map),
                pl.BlockSpec((tile_r, lanes), in_map),
            ],
            out_specs=pl.BlockSpec((8, lanes), lambda p, i: (p, 0)),
        ),
        compiler_params=pltpu.CompilerParams(
            dimension_semantics=("parallel", "arbitrary"),
            vmem_limit_bytes=vmem_limit,
        ),
    )(o2d, l2d)

    # Single tiny reduction + scaling outside the kernel.
    loss = jnp.sum(partials) * jnp.float32(inv_scale)
    # TODO(synk): the original module prints 'loss in nan' on NaN; caller can
    # replicate that host-side check on the returned scalar.
    return loss


if __name__ == "__main__":
    key = jax.random.PRNGKey(0)
    k_o, k_l, k_o2, k_l2, k_o3, k_l3 = jax.random.split(key, 6)

    # small shape consistent with the module: (batch, features)
    B, D = 2, 32
    outs = jax.nn.sigmoid(jax.random.normal(k_o, (B, D), dtype=jnp.float32))
    labels = (jax.random.uniform(k_l, (B, D)) > 0.5).astype(jnp.float32)

    loss_mean = normal_likelihood_bce_loss(outs, labels, cost_style="mean")
    loss_sum = normal_likelihood_bce_loss(outs, labels, cost_style="sum")
    jax.block_until_ready((loss_mean, loss_sum))

    # pure-JAX reference
    bce = -labels * jnp.log(outs + 1e-5) - (1 - labels) * jnp.log(1 - outs + 1e-5)
    ref_mean = jnp.mean(jnp.mean(bce, axis=1))
    ref_sum = jnp.sum(jnp.mean(bce, axis=1))
    assert jnp.allclose(loss_mean, ref_mean, rtol=1e-5, atol=1e-5)
    assert jnp.allclose(loss_sum, ref_sum, rtol=1e-5, atol=1e-4)
    assert not jnp.isnan(loss_mean)  # mirrors the module's NaN check

    # odd, non-aligned shape: exercises the minimal lane-pad + masked-tail path
    B2, D2 = 5, 37
    outs2 = jax.nn.sigmoid(jax.random.normal(k_o2, (B2, D2), dtype=jnp.float32))
    labels2 = (jax.random.uniform(k_l2, (B2, D2)) > 0.5).astype(jnp.float32)
    loss2 = normal_likelihood_bce_loss(outs2, labels2, cost_style="mean")
    jax.block_until_ready(loss2)
    bce2 = -labels2 * jnp.log(outs2 + 1e-5) - (1 - labels2) * jnp.log(1 - outs2 + 1e-5)
    ref2 = jnp.mean(jnp.mean(bce2, axis=1))
    assert jnp.allclose(loss2, ref2, rtol=1e-5, atol=1e-5)

    # lane-aligned (zero-copy, pad-free) shape, f32 and bf16 inputs:
    # exercises the unmasked fast path and native-dtype blocks.
    B3, D3 = 16, 1024
    outs3 = jax.nn.sigmoid(jax.random.normal(k_o3, (B3, D3), dtype=jnp.float32))
    labels3 = (jax.random.uniform(k_l3, (B3, D3)) > 0.5).astype(jnp.float32)
    loss3 = normal_likelihood_bce_loss(outs3, labels3, cost_style="mean")
    loss3_bf16 = normal_likelihood_bce_loss(outs3.astype(jnp.bfloat16),
                                            labels3.astype(jnp.bfloat16),
                                            cost_style="mean")
    jax.block_until_ready((loss3, loss3_bf16))
    bce3 = -labels3 * jnp.log(outs3 + 1e-5) - (1 - labels3) * jnp.log(1 - outs3 + 1e-5)
    ref3 = jnp.mean(jnp.mean(bce3, axis=1))
    assert jnp.allclose(loss3, ref3, rtol=1e-5, atol=1e-5)
    assert jnp.allclose(loss3_bf16, ref3, rtol=3e-2, atol=3e-2)

    print("KERNEL_OK")
</pallas_src>

<mosaic_0001>
module attributes {stable_mosaic.version = 11 : i64} {
  func.func @_bce_partial_kernel(%arg0: i32, %arg1: i32, %arg2: memref<8x128xf32, #tpu.memory_space<vmem>>, %arg3: memref<8x128xf32, #tpu.memory_space<vmem>>, %arg4: memref<8x128xf32, #tpu.memory_space<vmem>>) attributes {dimension_semantics = [#tpu.dimension_semantics<parallel>, #tpu.dimension_semantics<arbitrary>], iteration_bounds = array<i64: 1, 1>, scalar_prefetch = 0 : i64, scratch_operands = 0 : i64, tpu.core_type = #tpu.core_type<tc>, window_params = [{transform_indices = @transform_0, window_bounds = array<i64: 8, 128>}, {transform_indices = @transform_1, window_bounds = array<i64: 8, 128>}, {transform_indices = @transform_2, window_bounds = array<i64: 8, 128>}]} {
    %c0_i32 = arith.constant 0 : i32
    %0 = arith.cmpi eq, %arg1, %c0_i32 : i32
    %1 = arith.extui %0 : i1 to i32
    %c0_i32_0 = arith.constant 0 : i32
    %2 = arith.cmpi ne, %1, %c0_i32_0 : i32
    scf.if %2 {
      %cst = arith.constant 0.000000e+00 : f32
      %13 = vector.broadcast %cst : f32 to vector<8x128xf32>
      %c0 = arith.constant 0 : index
      %c0_5 = arith.constant 0 : index
      %14 = vector.load %arg4[%c0, %c0_5] : memref<8x128xf32, #tpu.memory_space<vmem>>, vector<8x128xf32>
      tpu.vector_store %arg4[%c0, %c0_5], %13 {strides = array<i32>} : memref<8x128xf32, #tpu.memory_space<vmem>>, vector<8x128xf32>,
    } else {
    }
    %c1_i32 = arith.constant 1 : i32
    %3 = arith.muli %arg0, %c1_i32 : i32
    %4 = arith.addi %3, %arg1 : i32
    %c8_i32 = arith.constant 8 : i32
    %5 = arith.muli %4, %c8_i32 : i32
    %c8_i32_1 = arith.constant 8 : i32
    %6 = arith.addi %5, %c8_i32_1 : i32
    %c0_i32_2 = arith.constant 0 : i32
    %7 = arith.cmpi sgt, %6, %c0_i32_2 : i32
    %8 = arith.extui %7 : i1 to i32
    %c0_i32_3 = arith.constant 0 : i32
    %9 = arith.cmpi ne, %8, %c0_i32_3 : i32
    scf.if %9 {
      %c0_i32_5 = arith.constant 0 : i32
      %c8_i32_6 = arith.constant 8 : i32
      %13 = arith.muli %c0_i32_5, %c8_i32_6 : i32
      %14 = tpu.assume_multiple %13, 8 : i32
      %15 = arith.index_cast %14 : i32 to index
      %c0 = arith.constant 0 : index
      %16 = vector.load %arg2[%15, %c0] : memref<8x128xf32, #tpu.memory_space<vmem>>, vector<8x128xf32>
      %17 = arith.index_cast %14 : i32 to index
      %c0_7 = arith.constant 0 : index
      %18 = vector.load %arg3[%17, %c0_7] : memref<8x128xf32, #tpu.memory_space<vmem>>, vector<8x128xf32>
      %cst = arith.constant 0.000000e+00 : f32
      %19 = vector.broadcast %cst : f32 to vector<8x128xf32>
      %20 = arith.subf %19, %18 : vector<8x128xf32>
      %cst_8 = arith.constant 9.99999974E-6 : f32
      %21 = vector.broadcast %cst_8 : f32 to vector<8x128xf32>
      %22 = arith.addf %16, %21 : vector<8x128xf32>
      %23 = math.log %22 : vector<8x128xf32>
      %24 = arith.mulf %20, %23 : vector<8x128xf32>
      %cst_9 = arith.constant 1.000000e+00 : f32
      %25 = vector.broadcast %cst_9 : f32 to vector<8x128xf32>
      %26 = arith.subf %25, %18 : vector<8x128xf32>
      %cst_10 = arith.constant 1.000000e+00 : f32
      %27 = vector.broadcast %cst_10 : f32 to vector<8x128xf32>
      %28 = arith.subf %27, %16 : vector<8x128xf32>
      %cst_11 = arith.constant 9.99999974E-6 : f32
      %29 = vector.broadcast %cst_11 : f32 to vector<8x128xf32>
      %30 = arith.addf %28, %29 : vector<8x128xf32>
      %31 = math.log %30 : vector<8x128xf32>
      %32 = arith.mulf %26, %31 : vector<8x128xf32>
      %33 = arith.subf %24, %32 : vector<8x128xf32>
      %34 = arith.addi %5, %14 : i32
      %35 = tpu.iota {dimensions = array<i32: 0>} : vector<8x128xi32>
      %36 = vector.broadcast %34 : i32 to vector<8x128xi32>
      %37 = arith.addi %36, %35 : vector<8x128xi32>
      %38 = tpu.iota {dimensions = array<i32: 1>} : vector<8x128xi32>
      %c0_i32_12 = arith.constant 0 : i32
      %39 = vector.broadcast %c0_i32_12 : i32 to vector<8x128xi32>
      %40 = arith.cmpi slt, %37, %39 : vector<8x128xi32>
      %c0_i32_13 = arith.constant 0 : i32
      %41 = vector.broadcast %c0_i32_13 : i32 to vector<8x128xi32>
      %42 = arith.cmpi eq, %37, %41 : vector<8x128xi32>
      %c64_i32 = arith.constant 64 : i32
      %43 = vector.broadcast %c64_i32 : i32 to vector<8x128xi32>
      %44 = arith.cmpi slt, %38, %43 : vector<8x128xi32>
      %45 = arith.andi %42, %44 : vector<8x128xi1>
      %46 = arith.ori %40, %45 : vector<8x128xi1>
      %cst_14 = arith.constant 0.000000e+00 : f32
      %47 = vector.broadcast %cst_14 : f32 to vector<8x128xf32>
      %48 = arith.select %46, %33, %47 : vector<8x128xi1>, vector<8x128xf32>
      %c0_15 = arith.constant 0 : index
      %c0_16 = arith.constant 0 : index
      %49 = vector.load %arg4[%c0_15, %c0_16] : memref<8x128xf32, #tpu.memory_space<vmem>>, vector<8x128xf32>
      %50 = vector.shape_cast %48 : vector<8x128xf32> to vector<1x8x128xf32>
      %cst_17 = arith.constant dense<0.000000e+00> : vector<8x128xf32>
      %51 = vector.multi_reduction <add>, %50, %cst_17 [0] : vector<1x8x128xf32> to vector<8x128xf32>
      %52 = arith.addf %49, %51 : vector<8x128xf32>
      %c0_18 = arith.constant 0 : index
      %c0_19 = arith.constant 0 : index
      %53 = vector.load %arg4[%c0_18, %c0_19] : memref<8x128xf32, #tpu.memory_space<vmem>>, vector<8x128xf32>
      tpu.vector_store %arg4[%c0_18, %c0_19], %52 {strides = array<i32>} : memref<8x128xf32, #tpu.memory_space<vmem>>, vector<8x128xf32>,
      %c1_i32_20 = arith.constant 1 : i32
    } else {
    }
    %true = arith.constant true
    %10 = arith.xori %7, %true : i1
    %11 = arith.extui %10 : i1 to i32
    %c0_i32_4 = arith.constant 0 : i32
    %12 = arith.cmpi ne, %11, %c0_i32_4 : i32
    scf.if %12 {
      %c0_i32_5 = arith.constant 0 : i32
      %c8_i32_6 = arith.constant 8 : i32
      %13 = arith.muli %c0_i32_5, %c8_i32_6 : i32
      %14 = tpu.assume_multiple %13, 8 : i32
      %15 = arith.index_cast %14 : i32 to index
      %c0 = arith.constant 0 : index
      %16 = vector.load %arg2[%15, %c0] : memref<8x128xf32, #tpu.memory_space<vmem>>, vector<8x128xf32>
      %17 = arith.index_cast %14 : i32 to index
      %c0_7 = arith.constant 0 : index
      %18 = vector.load %arg3[%17, %c0_7] : memref<8x128xf32, #tpu.memory_space<vmem>>, vector<8x128xf32>
      %cst = arith.constant 0.000000e+00 : f32
      %19 = vector.broadcast %cst : f32 to vector<8x128xf32>
      %20 = arith.subf %19, %18 : vector<8x128xf32>
      %cst_8 = arith.constant 9.99999974E-6 : f32
      %21 = vector.broadcast %cst_8 : f32 to vector<8x128xf32>
      %22 = arith.addf %16, %21 : vector<8x128xf32>
      %23 = math.log %22 : vector<8x128xf32>
      %24 = arith.mulf %20, %23 : vector<8x128xf32>
      %cst_9 = arith.constant 1.000000e+00 : f32
      %25 = vector.broadcast %cst_9 : f32 to vector<8x128xf32>
      %26 = arith.subf %25, %18 : vector<8x128xf32>
      %cst_10 = arith.constant 1.000000e+00 : f32
      %27 = vector.broadcast %cst_10 : f32 to vector<8x128xf32>
      %28 = arith.subf %27, %16 : vector<8x128xf32>
      %cst_11 = arith.constant 9.99999974E-6 : f32
      %29 = vector.broadcast %cst_11 : f32 to vector<8x128xf32>
      %30 = arith.addf %28, %29 : vector<8x128xf32>
      %31 = math.log %30 : vector<8x128xf32>
      %32 = arith.mulf %26, %31 : vector<8x128xf32>
      %33 = arith.subf %24, %32 : vector<8x128xf32>
      %c0_12 = arith.constant 0 : index
      %c0_13 = arith.constant 0 : index
      %34 = vector.load %arg4[%c0_12, %c0_13] : memref<8x128xf32, #tpu.memory_space<vmem>>, vector<8x128xf32>
      %35 = vector.shape_cast %33 : vector<8x128xf32> to vector<1x8x128xf32>
      %cst_14 = arith.constant dense<0.000000e+00> : vector<8x128xf32>
      %36 = vector.multi_reduction <add>, %35, %cst_14 [0] : vector<1x8x128xf32> to vector<8x128xf32>
      %37 = arith.addf %34, %36 : vector<8x128xf32>
      %c0_15 = arith.constant 0 : index
      %c0_16 = arith.constant 0 : index
      %38 = vector.load %arg4[%c0_15, %c0_16] : memref<8x128xf32, #tpu.memory_space<vmem>>, vector<8x128xf32>
      tpu.vector_store %arg4[%c0_15, %c0_16], %37 {strides = array<i32>} : memref<8x128xf32, #tpu.memory_space<vmem>>, vector<8x128xf32>,
      %c1_i32_17 = arith.constant 1 : i32
    } else {
    }
    return
  }
  func.func @transform_0(%arg0: i32, %arg1: i32) -> (i32, i32) {
    %c1_i32 = arith.constant 1 : i32
    %0 = arith.muli %arg0, %c1_i32 : i32
    %1 = arith.addi %0, %arg1 : i32
    %c0_i32 = arith.constant 0 : i32
    %2 = arith.minsi %1, %c0_i32 : i32
    %c0_i32_0 = arith.constant 0 : i32
    %c0_i32_1 = arith.constant 0 : i32
    return %2, %c0_i32_0 : i32, i32
  }
  func.func @transform_1(%arg0: i32, %arg1: i32) -> (i32, i32) {
    %c1_i32 = arith.constant 1 : i32
    %0 = arith.muli %arg0, %c1_i32 : i32
    %1 = arith.addi %0, %arg1 : i32
    %c0_i32 = arith.constant 0 : i32
    %2 = arith.minsi %1, %c0_i32 : i32
    %c0_i32_0 = arith.constant 0 : i32
    %c0_i32_1 = arith.constant 0 : i32
    return %2, %c0_i32_0 : i32, i32
  }
  func.func @transform_2(%arg0: i32, %arg1: i32) -> (i32, i32) {
    %c0_i32 = arith.constant 0 : i32
    %c0_i32_0 = arith.constant 0 : i32
    return %arg0, %c0_i32 : i32, i32
  }
}

</mosaic_0001>

<llo_original>
// kernel: tpu_custom_call.1
$region0: #{tpu_custom_call.1}
  #allocation0 [shape = 'u32[]', space=smem, size = 0x4, offset = 0x4, fixed_abs, tag = 'smem constant byte address 0x4 - core index']
  #allocation1 [shape = 'u32[144,128]{1,0:T(1,128)}', space=vmem, size = 0x12000, scoped, tag = 'internal scratch']
  %s0 = inlined_call_operand.hbm [shape: f32[8,128], index: 0, kind: input, shape index: {}]
  %s1 = inlined_call_operand.hbm [shape: f32[8,128], index: 1, kind: input, shape index: {}]
  %s2 = inlined_call_operand.hbm [shape: f32[8,128], index: 2, kind: output, shape index: {}]
  %s3 = sld [smem:[#allocation0]]
  $region38: #{tpu_custom_call.1} parent=0
    _
  %s5 = ssub.s32 1, %s3
  %s6 = scalar_select 0, %s5, %s3
  $region1: #{tpu_custom_call.1} parent=0
    #allocation2 [shape = 'u8[4096]{0}', space=vmem, size = 0x1000, scoped, tag = 'input window, operand 0, single buffered']
    #allocation3 [shape = 's32[1]{0}', space=sflag, size = 0x4, scoped, tag = 'scoped memory for tpu_custom_call.1']
    #allocation4 [shape = 's32[1]{0}', space=sflag, size = 0x4, scoped, tag = 'scoped memory for tpu_custom_call.1']
    #allocation5 [shape = 'u8[4096]{0}', space=vmem, size = 0x1000, scoped, tag = 'input window, operand 1, single buffered']
    #allocation6 [shape = 's32[1]{0}', space=sflag, size = 0x4, scoped, tag = 'scoped memory for tpu_custom_call.1']
    #allocation7 [shape = 'u8[4096]{0}', space=vmem, size = 0x1000, scoped, tag = 'output window, operand 0, single buffered']
    %7 = vsyncpa [#allocation3], 0
    %8 = vsyncpa [#allocation6], 0
    %9 = vsyncpa [#allocation4], 0
    // Predicated region
    $region2: #{tpu_custom_call.1} parent=1 // pred_check
      _
    $region3: #{tpu_custom_call.1} parent=1 // pred_check_branch
      %11 = sbr.rel (0) target = $region5
    $region4: #{tpu_custom_call.1} parent=1 // pred_region
      %s12 = sadd.s32 0, 0
      %p13 = scmp.lt.s32.totalorder %s12, 0
      %s14 = scalar_select %p13, %s12, 0
      %s16 = ssub.s32 128, 128
      %17 = vsyncadd [#allocation3], %s16
      %s18 = smul.addr %s14, 128
      %s19 = scalar_lea.hbm %s0, %s18
      %s21 = sshll.u32 [#allocation2], 4
      %s22 = int_to_ptr.vmem [resolvable:$true] %s21
      %24 = dma.hbm_to_vmem [thread:$0]  %s19, 128, %s22, [#allocation3]
    $region5: #{tpu_custom_call.1} parent=1 // pred_fallthru
      _
    // Predicated region
    $region6: #{tpu_custom_call.1} parent=1 // pred_check
      _
    $region7: #{tpu_custom_call.1} parent=1 // pred_check_branch
      %26 = sbr.rel (0) target = $region9
    $region8: #{tpu_custom_call.1} parent=1 // pred_region
      %s27 = sadd.s32 0, 0
      %p28 = scmp.lt.s32.totalorder %s27, 0
      %s29 = scalar_select %p28, %s27, 0
      %s31 = ssub.s32 128, 128
      %32 = vsyncadd [#allocation6], %s31
      %s33 = smul.addr %s29, 128
      %s34 = scalar_lea.hbm %s1, %s33
      %s36 = sshll.u32 [#allocation5], 4
      %s37 = int_to_ptr.vmem [resolvable:$true] %s36
      %39 = dma.hbm_to_vmem [thread:$0]  %s34, 128, %s37, [#allocation6]
    $region9: #{tpu_custom_call.1} parent=1 // pred_fallthru
      _
    // Predicated region
    $region10: #{tpu_custom_call.1} parent=1 // pred_check
      _
    $region11: #{tpu_custom_call.1} parent=1 // pred_check_branch
      %41 = sbr.rel (0) target = $region13
    $region12: #{tpu_custom_call.1} parent=1 // pred_region
      %42 = dma.done [#allocation3], 128
    $region13: #{tpu_custom_call.1} parent=1 // pred_fallthru
      _
    // Predicated region
    $region14: #{tpu_custom_call.1} parent=1 // pred_check
      _
    $region15: #{tpu_custom_call.1} parent=1 // pred_check_branch
      %44 = sbr.rel (0) target = $region17
    $region16: #{tpu_custom_call.1} parent=1 // pred_region
      %45 = dma.done [#allocation6], 128
    $region17: #{tpu_custom_call.1} parent=1 // pred_fallthru
      _
    %s46 = sadd.s32 0, 0
    %p47 = scmp.lt.s32.totalorder %s46, 0
    %s48 = scalar_select %p47, %s46, 0
    %s49 = sadd.s32 0, 0
    %p50 = scmp.lt.s32.totalorder %s49, 0
    %s51 = scalar_select %p50, %s49, 0
    %p52 = scmp.eq.s32.totalorder 0, 0
    // Predicated region
    $region18: #{tpu_custom_call.1} parent=1 // pred_check
      %p53 = pneg %p52
    $region19: #{tpu_custom_call.1} parent=1 // pred_check_branch
      %55 = sbr.rel (%p53) target = $region21
    $region20: #{tpu_custom_call.1} parent=1 // pred_region
      %56 = vst [vmem:[#allocation7] sm:$0xff] 0.0
    $region21: #{tpu_custom_call.1} parent=1 // pred_fallthru
      _
    %s57 = sadd.s32 0, 0
    %s58 = smul.u32 %s57, 8
    %s59 = sadd.s32 %s58, 8
    %p60 = scmp.gt.s32.totalorder %s59, 0
    // Predicated region
    $region22: #{tpu_custom_call.1} parent=1 // pred_check
      %p61 = pneg %p60
    $region23: #{tpu_custom_call.1} parent=1 // pred_check_branch
      %63 = sbr.rel (%p61) target = $region25
    $region24: #{tpu_custom_call.1} parent=1 // pred_region
      %v64 = vld [vmem:[#allocation2] sm:$0xff]
      %v65 = vld [vmem:[#allocation5] sm:$0xff]
      %v66 = vsub.f32 0.0, %v65
      %v67 = vadd.f32 %v64, 1e-05
      %v68 = vlog2.pop %v67
      %v69 = vmul.f32 %v68, 0.6931472
      %v70 = vmul.f32 %v66, %v69
      %v71 = vsub.f32 1.0, %v65
      %v72 = vsub.f32 1.0, %v64
      %v73 = vadd.f32 %v72, 1e-05
      %v74 = vlog2.pop %v73
      %v75 = vmul.f32 %v74, 0.6931472
      %v76 = vmul.f32 %v71, %v75
      %v77 = vsub.f32 %v70, %v76
      %s78 = sadd.s32 %s58, 0
      %v79 = vlaneseq
      %v80 = vshrl.u32 %v79, 7
      %v81 = vstv %s78
      %v82 = vadd.s32 %v81, %v80
      %v83 = vlaneseq
      %v84 = vand.u32 %v83, 127
      %vm85 = vcmp.lt.s32.totalorder %v82, 0
      %vm86 = vcmp.eq.s32.totalorder %v82, 0
      %vm87 = vcmp.lt.s32.totalorder %v84, 64
      %vm88 = vmand %vm86, %vm87
      %vm89 = vmor %vm85, %vm88
      %v90 = vsel %vm89, %v77, 0.0
      %v91 = vld [vmem:[#allocation7] sm:$0xff]
      %v92 = vadd.f32 %v90, 0.0
      %v93 = vadd.f32 %v91, %v92
      %94 = vst [vmem:[#allocation7] sm:$0xff] %v93
    $region25: #{tpu_custom_call.1} parent=1 // pred_fallthru
      _
    %p95 = scmp.le.s32.totalorder %s59, 0
    // Predicated region
    $region26: #{tpu_custom_call.1} parent=1 // pred_check
      %p96 = pneg %p95
    $region27: #{tpu_custom_call.1} parent=1 // pred_check_branch
      %98 = sbr.rel (%p96) target = $region29
    $region28: #{tpu_custom_call.1} parent=1 // pred_region
      %v99 = vld [vmem:[#allocation2] sm:$0xff]
      %v100 = vld [vmem:[#allocation5] sm:$0xff]
      %v101 = vsub.f32 0.0, %v100
      %v102 = vadd.f32 %v99, 1e-05
      %v103 = vlog2.pop %v102
      %v104 = vmul.f32 %v103, 0.6931472
      %v105 = vmul.f32 %v101, %v104
      %v106 = vsub.f32 1.0, %v100
      %v107 = vsub.f32 1.0, %v99
      %v108 = vadd.f32 %v107, 1e-05
      %v109 = vlog2.pop %v108
      %v110 = vmul.f32 %v109, 0.6931472
      %v111 = vmul.f32 %v106, %v110
      %v112 = vsub.f32 %v105, %v111
      %v113 = vld [vmem:[#allocation7] sm:$0xff]
      %v114 = vadd.f32 %v112, 0.0
      %v115 = vadd.f32 %v113, %v114
      %116 = vst [vmem:[#allocation7] sm:$0xff] %v115
    $region29: #{tpu_custom_call.1} parent=1 // pred_fallthru
      _
    // Predicated region
    $region30: #{tpu_custom_call.1} parent=1 // pred_check
      _
    $region31: #{tpu_custom_call.1} parent=1 // pred_check_branch
      %118 = sbr.rel (0) target = $region33
    $region32: #{tpu_custom_call.1} parent=1 // pred_region
      %s120 = ssub.s32 128, 128
      %121 = vsyncadd [#allocation4], %s120
      %s123 = sshll.u32 [#allocation7], 4
      %s124 = int_to_ptr.vmem [resolvable:$true] %s123
      %126 = dma.vmem_to_hbm [thread:$0]  %s124, 128, %s2, [#allocation4]
    $region33: #{tpu_custom_call.1} parent=1 // pred_fallthru
      _
    // Predicated region
    $region34: #{tpu_custom_call.1} parent=1 // pred_check
      _
    $region35: #{tpu_custom_call.1} parent=1 // pred_check_branch
      %128 = sbr.rel (0) target = $region37
    $region36: #{tpu_custom_call.1} parent=1 // pred_region
      %129 = dma.done [#allocation4], 128
    $region37: #{tpu_custom_call.1} parent=1 // pred_fallthru
      _
    %130 = vsyncpa [#allocation3], 1
    %131 = vsyncpa [#allocation6], 1
    %132 = vsyncpa [#allocation4], 1

</llo_original>
